<compile_context>
chip_gen: v7x
topology: tpu7x:2x2x1
jax: 0.10.0
libtpu: 0.0.40
codegen_flags: <defaults>
</compile_context>

<pallas_src>
import math

import jax
import jax.numpy as jnp
from jax.experimental import pallas as pl
from jax.experimental.pallas import tpu as pltpu


_LANE = 128                          # vreg lane width
_BLOCK_BYTES = 4 * 1024 * 1024       # ~4 MiB per (tile_b, tile_f) block
_VMEM_LIMIT_BYTES = 40 << 20         # explicit scoped-VMEM budget (all gens)


def _sublane_min(dtype) -> int:
    # f32/i32 -> 8, bf16/f16 -> 16, int8/fp8 -> 32
    itemsize = jnp.dtype(dtype).itemsize
    return 8 * max(1, 4 // max(itemsize, 1))


def _round_up(x: int, m: int) -> int:
    return ((x + m - 1) // m) * m


def _weight_sparse_kernel(x_ref, w_ref, o_ref):
    # x_ref: (tile_b, tile_f)  VMEM, native input dtype
    # w_ref: (1, tile_f)       VMEM, output dtype (broadcast over sublanes)
    # o_ref: (tile_b, tile_f)  VMEM, output dtype
    o_ref[...] = x_ref[...].astype(o_ref.dtype) * w_ref[...]


def weight_sparse_forward(x, weight):
    """Elementwise `x * weight`, weight broadcast over all leading axes.

    x:      (..., F) array (any float dtype)
    weight: (F,)     array
    """
    *lead, F = x.shape
    assert weight.shape == (F,), f"weight must be ({F},), got {weight.shape}"

    out_dtype = jnp.result_type(x.dtype, weight.dtype)
    # Weight is tiny -> cast in the wrapper.  x stays native (cast in-kernel).
    w = weight.astype(out_dtype)

    B = 1
    for d in lead:
        B *= d
    x2 = x.reshape(B, F)

    # ---- lane packing: fold `pack` rows into one so the last dim % 128 == 0 ----
    pack = _LANE // math.gcd(F, _LANE)
    if pack > 1 and B >= pack:
        pad_rows = (-B) % pack                   # <= pack-1 rows, only if ragged
        if pad_rows:
            x2 = jnp.pad(x2, ((0, pad_rows), (0, 0)))
        Bq = (B + pad_rows) // pack
        Fp = F * pack
        xq = x2.reshape(Bq, Fp)                  # contiguous reshape: free
        w_row = jnp.tile(w, pack).reshape(1, Fp)
    else:
        pack, pad_rows = 1, 0
        Bq, Fp = B, F
        xq = x2
        w_row = w.reshape(1, F)

    in_item = jnp.dtype(x.dtype).itemsize
    out_item = jnp.dtype(out_dtype).itemsize
    max_item = max(in_item, out_item)
    sub_min = max(_sublane_min(x.dtype), _sublane_min(out_dtype))

    # ---- feature tiling: prefer full rows (contiguous DMA, resident weight) ----
    f_pad = 0
    if sub_min * Fp * max_item <= _BLOCK_BYTES:
        tile_f = Fp                              # full-row strips, grid nf == 1
    else:
        if Fp % _LANE != 0:
            # Degenerate: huge feature dim that is neither a multiple of 128
            # nor lane-packable -> pad features once so it can be tiled.
            f_pad = _round_up(Fp, _LANE) - Fp
            xq = jnp.pad(xq, ((0, 0), (0, f_pad)))
            w_row = jnp.pad(w_row, ((0, 0), (0, f_pad)))
            Fp += f_pad
        tile_f = max(_LANE,
                     (_BLOCK_BYTES // (sub_min * max_item)) // _LANE * _LANE)
        tile_f = min(tile_f, Fp)

    # ---- batch tiling: fill block budget; keep >= 4 grid steps when possible ----
    tile_b = _BLOCK_BYTES // (tile_f * max_item)
    tile_b = max(sub_min, (tile_b // sub_min) * sub_min)
    tile_b = min(tile_b, max(sub_min, _round_up(pl.cdiv(Bq, 4), sub_min)))

    grid = (pl.cdiv(Bq, tile_b), pl.cdiv(Fp, tile_f))

    out = pl.pallas_call(
        _weight_sparse_kernel,
        out_shape=jax.ShapeDtypeStruct((Bq, Fp), out_dtype),
        grid_spec=pl.GridSpec(
            grid=grid,
            in_specs=[
                pl.BlockSpec((tile_b, tile_f), lambda i, j: (i, j)),
                # weight row: block index constant along batch; with nf == 1
                # it never changes -> stays resident in VMEM.
                pl.BlockSpec((1, tile_f), lambda i, j: (0, j)),
            ],
            out_specs=pl.BlockSpec((tile_b, tile_f), lambda i, j: (i, j)),
        ),
        compiler_params=pltpu.CompilerParams(
            dimension_semantics=("parallel", "parallel"),
            vmem_limit_bytes=_VMEM_LIMIT_BYTES,
        ),
    )(xq, w_row)

    if f_pad:
        out = out[:, :F]
    if pack > 1:
        out = out.reshape(Bq * pack, F)          # contiguous reshape: free
        if pad_rows:
            out = out[:B]
    return out.reshape(*lead, F)


if __name__ == "__main__":
    key = jax.random.PRNGKey(0)
    k_w, k_x, k_w2, k_x2, k_w3, k_x3 = jax.random.split(key, 6)

    # ---- shape matching the module: batch=8, in_features=32 (pack=4) ----
    in_features = 32
    batch = 8
    weight = jax.random.uniform(k_w, (in_features,), dtype=jnp.float32,
                                minval=0.0, maxval=1.0)
    x = jax.random.normal(k_x, (batch, in_features), dtype=jnp.float32)

    out = jax.block_until_ready(weight_sparse_forward(x, weight))
    ref = x * weight[None, :]
    assert out.shape == ref.shape and out.dtype == ref.dtype
    assert jnp.allclose(out, ref, atol=1e-6, rtol=1e-6)

    # ---- ragged batch, full-row path, no packing (F multiple of 128) ----
    b2, f2 = 260, 256
    w2 = jax.random.uniform(k_w2, (f2,), dtype=jnp.float32)
    x2 = jax.random.normal(k_x2, (b2, f2), dtype=jnp.float32)
    out2 = jax.block_until_ready(weight_sparse_forward(x2, w2))
    ref2 = x2 * w2[None, :]
    assert out2.shape == ref2.shape
    assert jnp.allclose(out2, ref2, atol=1e-6, rtol=1e-6)

    # ---- mixed dtype + non-divisor packing (F=48 -> pack=8) + pack-pad ----
    b3, f3 = 20, 48
    w3 = jax.random.uniform(k_w3, (f3,), dtype=jnp.float32)
    x3 = jax.random.normal(k_x3, (b3, f3), dtype=jnp.bfloat16)
    out3 = jax.block_until_ready(weight_sparse_forward(x3, w3))
    ref3 = x3 * w3[None, :]
    assert out3.shape == ref3.shape and out3.dtype == ref3.dtype
    assert jnp.allclose(out3.astype(jnp.float32), ref3.astype(jnp.float32),
                        atol=1e-2, rtol=1e-2)

    print("KERNEL_OK")
</pallas_src>

<mosaic_0001>
module attributes {stable_mosaic.version = 11 : i64} {
  func.func @_weight_sparse_kernel(%arg0: i32, %arg1: i32, %arg2: memref<8x128xf32, #tpu.memory_space<vmem>>, %arg3: memref<1x128xf32, #tpu.memory_space<vmem>>, %arg4: memref<8x128xf32, #tpu.memory_space<vmem>>) attributes {dimension_semantics = [#tpu.dimension_semantics<parallel>, #tpu.dimension_semantics<parallel>], iteration_bounds = array<i64: 1, 1>, scalar_prefetch = 0 : i64, scratch_operands = 0 : i64, tpu.core_type = #tpu.core_type<tc>, window_params = [{transform_indices = @transform_0, window_bounds = array<i64: 8, 128>}, {transform_indices = @transform_1, window_bounds = array<i64: 1, 128>}, {transform_indices = @transform_2, window_bounds = array<i64: 8, 128>}]} {
    %c0 = arith.constant 0 : index
    %c0_0 = arith.constant 0 : index
    %0 = vector.load %arg2[%c0, %c0_0] : memref<8x128xf32, #tpu.memory_space<vmem>>, vector<8x128xf32>
    %c0_1 = arith.constant 0 : index
    %c0_2 = arith.constant 0 : index
    %1 = vector.load %arg3[%c0_1, %c0_2] : memref<1x128xf32, #tpu.memory_space<vmem>>, vector<1x128xf32>
    %2 = vector.broadcast %1 : vector<1x128xf32> to vector<8x128xf32>
    %3 = arith.mulf %0, %2 : vector<8x128xf32>
    %c0_3 = arith.constant 0 : index
    %c0_4 = arith.constant 0 : index
    %4 = vector.load %arg4[%c0_3, %c0_4] : memref<8x128xf32, #tpu.memory_space<vmem>>, vector<8x128xf32>
    tpu.vector_store %arg4[%c0_3, %c0_4], %3 {strides = array<i32>} : memref<8x128xf32, #tpu.memory_space<vmem>>, vector<8x128xf32>,
    return
  }
  func.func @transform_0(%arg0: i32, %arg1: i32) -> (i32, i32) {
    %c0_i32 = arith.constant 0 : i32
    return %arg0, %arg1 : i32, i32
  }
  func.func @transform_1(%arg0: i32, %arg1: i32) -> (i32, i32) {
    %c0_i32 = arith.constant 0 : i32
    %c0_i32_0 = arith.constant 0 : i32
    return %c0_i32, %arg1 : i32, i32
  }
  func.func @transform_2(%arg0: i32, %arg1: i32) -> (i32, i32) {
    %c0_i32 = arith.constant 0 : i32
    return %arg0, %arg1 : i32, i32
  }
}

</mosaic_0001>

<llo_original>
// kernel: tpu_custom_call.1
$region0: #{tpu_custom_call.1}
  #allocation0 [shape = 'u32[]', space=smem, size = 0x4, offset = 0x4, fixed_abs, tag = 'smem constant byte address 0x4 - core index']
  #allocation1 [shape = 'u32[144,128]{1,0:T(1,128)}', space=vmem, size = 0x12000, scoped, tag = 'internal scratch']
  %s0 = inlined_call_operand.hbm [shape: f32[2,128], index: 0, kind: input, shape index: {}]
  %s1 = inlined_call_operand.vmem [shape: f32[1,128], index: 1, kind: input, shape index: {}]
  %s2 = inlined_call_operand.hbm [shape: f32[2,128], index: 2, kind: output, shape index: {}]
  %s3 = sld [smem:[#allocation0]]
  $region22: #{tpu_custom_call.1} parent=0
    _
  %s5 = ssub.s32 1, %s3
  %s6 = scalar_select 0, %s5, %s3
  $region1: #{tpu_custom_call.1} parent=0
    #allocation2 [shape = 'u8[4096]{0}', space=vmem, size = 0x1000, scoped, tag = 'input window, operand 0, single buffered']
    #allocation3 [shape = 's32[1]{0}', space=sflag, size = 0x4, scoped, tag = 'scoped memory for tpu_custom_call.1']
    #allocation4 [shape = 's32[1]{0}', space=sflag, size = 0x4, scoped, tag = 'scoped memory for tpu_custom_call.1']
    #allocation5 [shape = 'u8[4096]{0}', space=vmem, size = 0x1000, scoped, tag = 'output window, operand 0, single buffered']
    %7 = vsyncpa [#allocation3], 0
    %8 = vsyncpa [#allocation4], 0
    // Predicated region
    $region2: #{tpu_custom_call.1} parent=1 // pred_check
      _
    $region3: #{tpu_custom_call.1} parent=1 // pred_check_branch
      %10 = sbr.rel (0) target = $region5
    $region4: #{tpu_custom_call.1} parent=1 // pred_region
      %s12 = ssub.s32 128, 32
      %13 = vsyncadd [#allocation3], %s12
      %s14 = sshll.u32 [#allocation2], 4
      %s15 = int_to_ptr.vmem [resolvable:$true] %s14
      %20 = dma.hbm_to_vmem [thread:$0]  %s0, 32, %s15, [#allocation3], 32, 32, 2
    $region5: #{tpu_custom_call.1} parent=1 // pred_fallthru
      _
    // Predicated region
    $region6: #{tpu_custom_call.1} parent=1 // pred_check
      _
    $region7: #{tpu_custom_call.1} parent=1 // pred_check_branch
      %22 = sbr.rel (0) target = $region9
    $region8: #{tpu_custom_call.1} parent=1 // pred_region
      _
    $region9: #{tpu_custom_call.1} parent=1 // pred_fallthru
      _
    // Predicated region
    $region10: #{tpu_custom_call.1} parent=1 // pred_check
      _
    $region11: #{tpu_custom_call.1} parent=1 // pred_check_branch
      %24 = sbr.rel (0) target = $region13
    $region12: #{tpu_custom_call.1} parent=1 // pred_region
      %25 = dma.done [#allocation3], 128
    $region13: #{tpu_custom_call.1} parent=1 // pred_fallthru
      _
    %v26 = vld [vmem:[#allocation2] sm:$0xff]
    %v27 = vld [vmem:[%s1] sm:$0x1]
    %v29 = vlaneseq
    %v30 = vshrl.u32 %v29, 7
    %v31 = vsub.s32 0, %v30
    %v32 = vrot.slane %v27, %v31
    %v34 = vmul.f32 %v26, %v32
    %35 = vst [vmem:[#allocation5] sm:$0xff] %v34
    // Predicated region
    $region14: #{tpu_custom_call.1} parent=1 // pred_check
      _
    $region15: #{tpu_custom_call.1} parent=1 // pred_check_branch
      %37 = sbr.rel (0) target = $region17
    $region16: #{tpu_custom_call.1} parent=1 // pred_region
      %s39 = ssub.s32 128, 32
      %40 = vsyncadd [#allocation4], %s39
      %s41 = sshll.u32 [#allocation5], 4
      %s42 = int_to_ptr.vmem [resolvable:$true] %s41
      %47 = dma.vmem_to_hbm [thread:$0]  %s42, 32, %s2, [#allocation4], 32, 32, 2
    $region17: #{tpu_custom_call.1} parent=1 // pred_fallthru
      _
    // Predicated region
    $region18: #{tpu_custom_call.1} parent=1 // pred_check
      _
    $region19: #{tpu_custom_call.1} parent=1 // pred_check_branch
      %49 = sbr.rel (0) target = $region21
    $region20: #{tpu_custom_call.1} parent=1 // pred_region
      %50 = dma.done [#allocation4], 128
    $region21: #{tpu_custom_call.1} parent=1 // pred_fallthru
      _
    %51 = vsyncpa [#allocation3], 1
    %52 = vsyncpa [#allocation4], 1

</llo_original>
